<compile_context>
chip_gen: v5e
topology: v5e:2x2
jax: 0.10.0
libtpu: 0.0.40
codegen_flags: <defaults>
</compile_context>

<pallas_src>
import jax
import jax.numpy as jnp
from jax import lax
from jax.experimental import pallas as pl
from jax.experimental.pallas import tpu as pltpu

_MIB = 1024 * 1024

# Contract dim 0 (the seq-len L) of the (L, V) activation tile against dim 0 of
# the pre-transposed weight (L, D): trans-A matmul, no materialized transpose.
_CONTRACT_L = (((0,), (0,)), ((), ()))


# --------------------------------------------------------------------------
# VMEM budget / footprint helpers (generation-aware, padding-aware).
# --------------------------------------------------------------------------
def _round_up(a, m):
    return (a + m - 1) // m * m


def _padded_bytes(shape, dtype):
    """Bytes a 2-D tile really occupies in VMEM: last dim padded to 128 lanes,
    second-to-last padded to the dtype's native sublane tile (f32:8, bf16:16)."""
    isz = jnp.dtype(dtype).itemsize
    dims = list(int(d) for d in shape)
    if len(dims) >= 1:
        dims[-1] = _round_up(dims[-1], 128)
    if len(dims) >= 2:
        dims[-2] = _round_up(dims[-2], max(8, 32 // isz))
    n = 1
    for d in dims:
        n *= d
    return n * isz


def _vmem_budget():
    """Returns (per-step working-set budget, vmem_limit cap), generation aware."""
    cap = 0
    try:
        cap = int(pltpu.get_tpu_info().vmem_capacity_bytes)
    except Exception:
        cap = 0
    if cap <= 0:
        cap = 64 * _MIB                      # conservative if the query fails
    if cap >= 96 * _MIB:                     # v5e / v6e class (128 MiB VMEM)
        return 72 * _MIB, 96 * _MIB
    return 24 * _MIB, 42 * _MIB              # v7x class (64 MiB VMEM per core)


def _vmem_limit(footprint_bytes, limit_cap):
    return int(min(max(footprint_bytes + 8 * _MIB, 32 * _MIB), limit_cap))


# --------------------------------------------------------------------------
# In-kernel helpers.
# --------------------------------------------------------------------------
def _for_each(tb, fn):
    """Loop i in [0, tb): fully unrolled for short batches (LLO visibility),
    rolled lax.fori_loop for long ones."""
    if tb <= 8:
        for i in range(tb):
            fn(i)
    else:
        def body(i, carry):
            fn(i)
            return carry
        lax.fori_loop(0, tb, body, 0)


def _concat_lanes(a, b):
    """Concat along the lane (last) axis.  Packed dtypes (bf16, ...) are routed
    through f32 so the unaligned lane-shift stays on the 32-bit path; the data
    moved is only L x M elements, negligible."""
    if jnp.dtype(a.dtype).itemsize >= 4:
        return jnp.concatenate([a, b], axis=-1)
    cat = jnp.concatenate([a.astype(jnp.float32), b.astype(jnp.float32)], axis=-1)
    return cat.astype(a.dtype)


# --------------------------------------------------------------------------
# Kernels.
# --------------------------------------------------------------------------
def _pair_kernel(x_ref, xm_ref, w_ref, b_ref, o_ref):
    # x_ref: (TB, L, N)  xm_ref: (TB, L, M)  w_ref: (L, TD)  b_ref: (1, TD)
    # o_ref: (TB, V, TD) with V = N + M.
    w = w_ref[...]
    b = b_ref[...]
    tb = o_ref.shape[0]

    def one_batch(i):
        # Fuse permute + concat into a single trans-A dot and a single aligned,
        # lane/sublane-dense (V, TD) store (no masked-store epilogue for ragged
        # N, no second MXU weight push for the tiny x_mark group).
        xc = _concat_lanes(x_ref[i], xm_ref[i])                      # (L, V)
        y = lax.dot_general(xc, w, _CONTRACT_L,
                            preferred_element_type=jnp.float32)      # (V, TD)
        o_ref[i] = (y + b).astype(o_ref.dtype)

    _for_each(tb, one_batch)


def _single_kernel(x_ref, w_ref, b_ref, o_ref):
    # x_ref: (TB, L, TV)  w_ref: (L, D)  b_ref: (1, D)  o_ref: (TB, TV, D)
    w = w_ref[...]
    b = b_ref[...]
    tb = o_ref.shape[0]

    def one_batch(i):
        y = lax.dot_general(x_ref[i], w, _CONTRACT_L,
                            preferred_element_type=jnp.float32)      # (TV, D)
        o_ref[i] = (y + b).astype(o_ref.dtype)

    _for_each(tb, one_batch)


# --------------------------------------------------------------------------
# Tile selection (padding-aware footprints, double-buffering included).
# --------------------------------------------------------------------------
def _pick_pair_tiles(B, L, N, M, D, in_dtype, out_dtype, budget):
    V = N + M

    def fixed(td):
        return (2 * (_padded_bytes((L, td), in_dtype)            # weight (x2 buf)
                     + _padded_bytes((1, td), in_dtype))         # bias   (x2 buf)
                + _padded_bytes((L, V), jnp.float32)             # concat temp
                + _padded_bytes((V, td), jnp.float32))           # f32 dot result

    def per_b(td):
        return 2 * (_padded_bytes((L, N), in_dtype)
                    + _padded_bytes((L, M), in_dtype)
                    + _padded_bytes((V, td), out_dtype))

    candidates = [D] + [t for t in (2048, 1024, 512, 256, 128)
                        if t < D and D % t == 0]
    for td in candidates:
        f, p = fixed(td), per_b(td)
        if f + p <= budget:
            tb = int(min(B, max(1, (budget - f) // p)))
            return td, tb, f, p
    return None, None, None, None


def _pick_single_tiles(B, L, N, D, in_dtype, out_dtype, budget):
    def fixed(tv):
        return (2 * (_padded_bytes((L, D), in_dtype)
                     + _padded_bytes((1, D), in_dtype))
                + _padded_bytes((tv, D), jnp.float32))

    def per_b(tv):
        return 2 * (_padded_bytes((L, tv), in_dtype)
                    + _padded_bytes((tv, D), out_dtype))

    candidates = [N] + [t for t in (4096, 2048, 1024, 512, 256, 128) if t < N]
    for tv in candidates:
        f, p = fixed(tv), per_b(tv)
        if f + p <= budget:
            tb = int(min(B, max(1, (budget - f) // p)))
            return tv, tb, f, p
    tv = min(N, 128)                      # minimum tile; vmem_limit still capped
    return tv, 1, fixed(tv), per_b(tv)


# --------------------------------------------------------------------------
# pallas_call drivers.
# --------------------------------------------------------------------------
def _embed_pair(x, x_mark, w_t, b2d, budget, limit_cap):
    B, L, N = x.shape
    M = x_mark.shape[2]
    V = N + M
    D = w_t.shape[1]
    out_dtype = x.dtype
    isz = jnp.dtype(x.dtype).itemsize

    td, tb, fixed_b, per_b = _pick_pair_tiles(B, L, N, M, D, x.dtype,
                                              out_dtype, budget)
    if td is None:
        return None                          # caller falls back

    gd = pl.cdiv(D, td)
    if gd == 1 and B >= 2:
        tb = min(tb, -(-B // 2))             # keep >=2 parallel steps (v7x 2 TCs)
    gb = pl.cdiv(B, tb)
    footprint = fixed_b + tb * per_b

    return pl.pallas_call(
        _pair_kernel,
        out_shape=jax.ShapeDtypeStruct((B, V, D), out_dtype),
        grid_spec=pltpu.PrefetchScalarGridSpec(
            num_scalar_prefetch=0,
            grid=(gb, gd),                   # d innermost: x / x_mark stay resident
            in_specs=[
                pl.BlockSpec((tb, L, N), lambda b, d: (b, 0, 0)),  # x (native layout)
                pl.BlockSpec((tb, L, M), lambda b, d: (b, 0, 0)),  # x_mark
                pl.BlockSpec((L, td), lambda b, d: (0, d)),        # weight tile
                pl.BlockSpec((1, td), lambda b, d: (0, d)),        # bias tile
            ],
            out_specs=pl.BlockSpec((tb, V, td), lambda b, d: (b, 0, d)),
        ),
        compiler_params=pltpu.CompilerParams(
            dimension_semantics=("parallel", "parallel"),
            vmem_limit_bytes=_vmem_limit(footprint, limit_cap),
        ),
        cost_estimate=pl.CostEstimate(
            flops=2 * B * V * L * D,
            transcendentals=0,
            bytes_accessed=isz * (B * L * V + L * D + D + B * V * D),
        ),
    )(x, x_mark, w_t, b2d)


def _embed_single(x, w_t, b2d, budget, limit_cap):
    B, L, N = x.shape
    D = w_t.shape[1]
    out_dtype = x.dtype
    isz = jnp.dtype(x.dtype).itemsize

    tv, tb, fixed_b, per_b = _pick_single_tiles(B, L, N, D, x.dtype,
                                                out_dtype, budget)
    gv = pl.cdiv(N, tv)
    if gv == 1 and B >= 2:
        tb = min(tb, -(-B // 2))
    gb = pl.cdiv(B, tb)
    footprint = fixed_b + tb * per_b

    return pl.pallas_call(
        _single_kernel,
        out_shape=jax.ShapeDtypeStruct((B, N, D), out_dtype),
        grid_spec=pltpu.PrefetchScalarGridSpec(
            num_scalar_prefetch=0,
            grid=(gb, gv),
            in_specs=[
                pl.BlockSpec((tb, L, tv), lambda b, v: (b, 0, v)),  # variate tile
                pl.BlockSpec((L, D), lambda b, v: (0, 0)),          # weight (resident)
                pl.BlockSpec((1, D), lambda b, v: (0, 0)),          # bias   (resident)
            ],
            out_specs=pl.BlockSpec((tb, tv, D), lambda b, v: (b, v, 0)),
        ),
        compiler_params=pltpu.CompilerParams(
            dimension_semantics=("parallel", "parallel"),
            vmem_limit_bytes=_vmem_limit(footprint, limit_cap),
        ),
        cost_estimate=pl.CostEstimate(
            flops=2 * B * N * L * D,
            transcendentals=0,
            bytes_accessed=isz * (B * L * N + L * D + D + B * N * D),
        ),
    )(x, w_t, b2d)


# --------------------------------------------------------------------------
# Public wrapper (forward pass, eval mode).
# --------------------------------------------------------------------------
def data_embedding_inverted(x, x_mark, weight, bias, *,
                            compute_dtype=None, vmem_budget_bytes=None):
    """
    x:      [B, L, N]
    x_mark: [B, L, M] or None
    weight: [D, L]   (PyTorch nn.Linear layout: [out_features, in_features])
    bias:   [D]
    returns [B, N(+M), D]   (dropout = identity at inference)

    compute_dtype: optional (e.g. jnp.bfloat16).  Strongly recommended where the
      model tolerates it: this op is HBM-bandwidth bound on all TPU generations,
      so bf16 inputs/outputs roughly halve wall-clock while the MXU still
      accumulates in f32.  Note: this also changes the returned dtype to bf16
      (the PyTorch reference returns f32).
    vmem_budget_bytes: optional override of the per-step VMEM working-set budget
      (mainly for testing the tiled paths).
    """
    if x.ndim != 3:
        raise ValueError("x must be [B, L, N]")
    D = weight.shape[0]

    if compute_dtype is not None:
        x = x.astype(compute_dtype)
        if x_mark is not None:
            x_mark = x_mark.astype(compute_dtype)
        weight = weight.astype(compute_dtype)
        bias = bias.astype(compute_dtype)

    budget, limit_cap = _vmem_budget()
    if vmem_budget_bytes is not None:
        budget = int(vmem_budget_bytes)

    w_t = jnp.transpose(weight, (1, 0))      # [L, D] -- tiny, done once
    b2d = bias.reshape(1, D)

    if x_mark is None:
        return _embed_single(x, w_t, b2d, budget, limit_cap)

    out = _embed_pair(x, x_mark, w_t, b2d, budget, limit_cap)
    if out is not None:
        return out

    # Last resort (V so large that even a TB=1 / 128-wide D-tile step does not
    # fit the budget): one cheap, contiguous last-axis concat (still no
    # transpose) and the variate-tiled kernel.
    # TODO(synk): express this rare case without the extra HBM concat.
    x_cat = jnp.concatenate([x, x_mark], axis=-1)
    return _embed_single(x_cat, w_t, b2d, budget, limit_cap)


# --------------------------------------------------------------------------
# Self-test.
# --------------------------------------------------------------------------
def _reference(x, x_mark, weight, bias):
    parts = [jnp.transpose(x, (0, 2, 1))]
    if x_mark is not None:
        parts.append(jnp.transpose(x_mark, (0, 2, 1)))
    xc = jnp.concatenate(parts, axis=1) if len(parts) > 1 else parts[0]
    return (jnp.einsum('bvl,dl->bvd', xc.astype(jnp.float32),
                       weight.astype(jnp.float32))
            + bias.astype(jnp.float32))


if __name__ == "__main__":
    def make(B, L, N, M, D, k):
        kx, km, kw, kb = jax.random.split(k, 4)
        bound = 1.0 / (L ** 0.5)
        x = jax.random.normal(kx, (B, L, N), dtype=jnp.float32)
        xm = jax.random.normal(km, (B, L, M), dtype=jnp.float32) if M else None
        w = jax.random.uniform(kw, (D, L), minval=-bound, maxval=bound,
                               dtype=jnp.float32)
        b = jax.random.uniform(kb, (D,), minval=-bound, maxval=bound,
                               dtype=jnp.float32)
        return x, xm, w, b

    keys = jax.random.split(jax.random.PRNGKey(0), 4)

    # 1) fused pair path: single dot + single aligned (V, D) store, batch-blocked.
    x, xm, w, b = make(2, 8, 4, 3, 32, keys[0])
    out = jax.block_until_ready(data_embedding_inverted(x, xm, w, b))
    assert out.shape == (2, 7, 32)
    assert jnp.allclose(out, _reference(x, xm, w, b), atol=1e-5, rtol=1e-5)

    # 2) x_mark is None -> single-input path, full-width variate block.
    out2 = jax.block_until_ready(data_embedding_inverted(x, None, w, b))
    assert out2.shape == (2, 4, 32)
    assert jnp.allclose(out2, _reference(x, None, w, b), atol=1e-5, rtol=1e-5)

    # 3) small forced budget -> D-tiled pair path (ragged V = N + M, x resident
    #    across D tiles, aligned stores).
    x3, xm3, w3, b3 = make(3, 8, 200, 3, 256, keys[1])
    out3 = jax.block_until_ready(
        data_embedding_inverted(x3, xm3, w3, b3, vmem_budget_bytes=512 * 1024))
    assert out3.shape == (3, 203, 256)
    assert jnp.allclose(out3, _reference(x3, xm3, w3, b3), atol=1e-4, rtol=1e-4)

    # 4) small forced budget, x_mark=None -> variate-tiled path with ragged tail.
    out4 = jax.block_until_ready(
        data_embedding_inverted(x3, None, w3, b3, vmem_budget_bytes=512 * 1024))
    assert out4.shape == (3, 200, 256)
    assert jnp.allclose(out4, _reference(x3, None, w3, b3), atol=1e-4, rtol=1e-4)

    # 5) tiny forced budget -> last-resort concat fallback still correct.
    out5 = jax.block_until_ready(
        data_embedding_inverted(x3, xm3, w3, b3, vmem_budget_bytes=64 * 1024))
    assert out5.shape == (3, 203, 256)
    assert jnp.allclose(out5, _reference(x3, xm3, w3, b3), atol=1e-4, rtol=1e-4)

    # 6) reduced-precision path (bf16 in/out, f32 MXU accumulation).
    out6 = jax.block_until_ready(
        data_embedding_inverted(x, xm, w, b, compute_dtype=jnp.bfloat16))
    assert out6.shape == (2, 7, 32)
    assert jnp.allclose(out6.astype(jnp.float32), _reference(x, xm, w, b),
                        atol=5e-2, rtol=5e-2)

    print("KERNEL_OK")
</pallas_src>

<mosaic_0001>
module attributes {stable_mosaic.version = 11 : i64} {
  func.func @_pair_kernel(%arg0: i32, %arg1: i32, %arg2: memref<1x8x4xf32, #tpu.memory_space<vmem>>, %arg3: memref<1x8x3xf32, #tpu.memory_space<vmem>>, %arg4: memref<8x32xf32, #tpu.memory_space<vmem>>, %arg5: memref<1x32xf32, #tpu.memory_space<vmem>>, %arg6: memref<1x7x32xf32, #tpu.memory_space<vmem>>) attributes {dimension_semantics = [#tpu.dimension_semantics<parallel>, #tpu.dimension_semantics<parallel>], iteration_bounds = array<i64: 2, 1>, scalar_prefetch = 0 : i64, scratch_operands = 0 : i64, tpu.core_type = #tpu.core_type<tc>, window_params = [{transform_indices = @transform_0, window_bounds = array<i64: 1, 8, 4>}, {transform_indices = @transform_1, window_bounds = array<i64: 1, 8, 3>}, {transform_indices = @transform_2, window_bounds = array<i64: 8, 32>}, {transform_indices = @transform_3, window_bounds = array<i64: 1, 32>}, {transform_indices = @transform_4, window_bounds = array<i64: 1, 7, 32>}]} {
    %c0 = arith.constant 0 : index
    %c0_0 = arith.constant 0 : index
    %0 = vector.load %arg4[%c0, %c0_0] : memref<8x32xf32, #tpu.memory_space<vmem>>, vector<8x32xf32>
    %c0_1 = arith.constant 0 : index
    %c0_2 = arith.constant 0 : index
    %1 = vector.load %arg5[%c0_1, %c0_2] : memref<1x32xf32, #tpu.memory_space<vmem>>, vector<1x32xf32>
    %c0_3 = arith.constant 0 : index
    %c0_4 = arith.constant 0 : index
    %c0_5 = arith.constant 0 : index
    %2 = vector.load %arg2[%c0_3, %c0_4, %c0_5] : memref<1x8x4xf32, #tpu.memory_space<vmem>>, vector<1x8x4xf32>
    %3 = vector.shape_cast %2 : vector<1x8x4xf32> to vector<8x4xf32>
    %c0_6 = arith.constant 0 : index
    %c0_7 = arith.constant 0 : index
    %c0_8 = arith.constant 0 : index
    %4 = vector.load %arg3[%c0_6, %c0_7, %c0_8] : memref<1x8x3xf32, #tpu.memory_space<vmem>>, vector<1x8x3xf32>
    %5 = vector.shape_cast %4 : vector<1x8x3xf32> to vector<8x3xf32>
    %6 = tpu.concatenate %3, %5 in 1 : vector<8x4xf32>, vector<8x3xf32> -> vector<8x7xf32>
    %cst = arith.constant dense<0.000000e+00> : vector<7x32xf32>
    %7 = tpu.matmul %6, %0, %cst {dimension_numbers = #tpu.dot_dimension_numbers<[0], [0], [1], [1], [0, 1, 1, 1], [], []>} : vector<8x7xf32>, vector<8x32xf32>, vector<7x32xf32> -> vector<7x32xf32>
    %8 = vector.broadcast %1 : vector<1x32xf32> to vector<7x32xf32>
    %9 = arith.addf %7, %8 : vector<7x32xf32>
    %c0_9 = arith.constant 0 : index
    %c0_10 = arith.constant 0 : index
    %c0_11 = arith.constant 0 : index
    %10 = vector.load %arg6[%c0_9, %c0_10, %c0_11] : memref<1x7x32xf32, #tpu.memory_space<vmem>>, vector<1x7x32xf32>
    %11 = vector.shape_cast %10 : vector<1x7x32xf32> to vector<7x32xf32>
    %12 = vector.shape_cast %9 : vector<7x32xf32> to vector<1x7x32xf32>
    tpu.vector_store %arg6[%c0_9, %c0_10, %c0_11], %12 {strides = array<i32>} : memref<1x7x32xf32, #tpu.memory_space<vmem>>, vector<1x7x32xf32>,
    return
  }
  func.func @transform_0(%arg0: i32, %arg1: i32) -> (i32, i32, i32) {
    %c0_i32 = arith.constant 0 : i32
    %c0_i32_0 = arith.constant 0 : i32
    %c0_i32_1 = arith.constant 0 : i32
    return %arg0, %c0_i32, %c0_i32_0 : i32, i32, i32
  }
  func.func @transform_1(%arg0: i32, %arg1: i32) -> (i32, i32, i32) {
    %c0_i32 = arith.constant 0 : i32
    %c0_i32_0 = arith.constant 0 : i32
    %c0_i32_1 = arith.constant 0 : i32
    return %arg0, %c0_i32, %c0_i32_0 : i32, i32, i32
  }
  func.func @transform_2(%arg0: i32, %arg1: i32) -> (i32, i32) {
    %c0_i32 = arith.constant 0 : i32
    %c0_i32_0 = arith.constant 0 : i32
    return %c0_i32, %arg1 : i32, i32
  }
  func.func @transform_3(%arg0: i32, %arg1: i32) -> (i32, i32) {
    %c0_i32 = arith.constant 0 : i32
    %c0_i32_0 = arith.constant 0 : i32
    return %c0_i32, %arg1 : i32, i32
  }
  func.func @transform_4(%arg0: i32, %arg1: i32) -> (i32, i32, i32) {
    %c0_i32 = arith.constant 0 : i32
    %c0_i32_0 = arith.constant 0 : i32
    return %arg0, %c0_i32, %arg1 : i32, i32, i32
  }
}

</mosaic_0001>

<llo_original>
// kernel: tpu_custom_call.1
$region0: #{tpu_custom_call.1}
  #allocation0 [shape = 'u32[]', space=smem, size = 0x4, offset = 0x4, fixed_abs, tag = 'smem constant byte address 0x4 - core index']
  #allocation1 [shape = 'u32[72,128]{1,0:T(1,128)}', space=vmem, size = 0x9000, scoped, tag = 'internal scratch']
  %s0 = inlined_call_operand.vmem [shape: f32[2,8,4], index: 0, kind: input, shape index: {}]
  %s1 = inlined_call_operand.vmem [shape: f32[2,8,3], index: 1, kind: input, shape index: {}]
  %s2 = inlined_call_operand.vmem [shape: f32[8,32], index: 2, kind: input, shape index: {}]
  %s3 = inlined_call_operand.vmem [shape: f32[1,32], index: 3, kind: input, shape index: {}]
  %s4 = inlined_call_operand.vmem [shape: f32[2,7,32], index: 4, kind: output, shape index: {}]
  %s5 = sld [smem:[#allocation0]]
  $region49: #{tpu_custom_call.1} parent=0
    _
  %s7 = ssub.s32 1, %s5
  %s8 = scalar_select 0, %s7, %s5
  loop: start=0, step=1, limit=4
  $region2: #{tpu_custom_call.1} parent=0 // loop_pre_header
    _
  $region3: #{tpu_custom_call.1} parent=0 // loop_header
    %s10 = sphi 0, %s14
    %p11 = scmp.ge.s32.totalorder %s10, 4
    %s17 = sphi 0, %s29
    %s18 = sphi 0, %s25
    %s19 = sphi 0, %s17
    %s20 = sphi 0, %s18
    %s21 = sphi 0, %s19
    %s22 = sphi 0, %s20
    %s32 = sphi 0, %s34
    %s35 = sphi 0, %s32
    %s36 = sphi 0, %s35
    %s52 = sphi 0, %s36
    %s58 = sphi 0, %s60
    %s61 = sphi 0, %s58
    %s62 = sphi 0, %s61
    %s78 = sphi 0, %s62
    %s84 = sphi 0, %s86
    %s87 = sphi 0, %s84
    %s88 = sphi 0, %s87
    %s104 = sphi 0, %s88
    %s110 = sphi 0, %s112
    %s113 = sphi 0, %s110
    %s114 = sphi 0, %s113
    %s130 = sphi 0, %s114
    %s138 = sphi 0, %s140
    %s141 = sphi 0, %s138
    %s142 = sphi 0, %s141
    %s158 = sphi 0, %s142
  $region4: #{tpu_custom_call.1} parent=0 // loop_header_branch
    %13 = sbr.rel (%p11) target = $region8
  $region5: #{tpu_custom_call.1} parent=0 // loop_body
    %s15 = ssub.s32 %s10, 1
    %s16 = ssub.s32 %s10, 2
    %s23 = sadd.s32 1, %s18
    %p24 = scmp.ge.s32.totalorder %s23, 1
    %s25 = scalar_select %p24, 0, %s23
    %s26 = sadd.s32 1, %s17
    %s27 = scalar_select %p24, %s26, %s17
    %p28 = scmp.ge.s32.totalorder %s27, 2
    %s29 = scalar_select %p28, 0, %s27
    %s30 = ssub.s32 %s17, %s29
    %p31 = scmp.eq.s32.totalorder %s30, 0
    %s33 = sadd.s32 %s32, 1
    %s34 = scalar_select %p31, %s32, %s33
    %p37 = pneg %p31
    %p38 = scmp.eq.s32.totalorder %s10, 1
    %p39 = por %p37, %p38
    %p40 = scmp.ne.s32.totalorder %s32, %s35
    %p41 = scmp.eq.s32.totalorder %s10, 0
    %p42 = por %p40, %p41
    %p43 = scmp.ne.s32.totalorder %s32, %s35
    %p44 = scmp.eq.s32.totalorder %s15, 1
    %p45 = por %p43, %p44
    %p46 = scmp.ne.s32.totalorder %s35, %s36
    %p47 = scmp.eq.s32.totalorder %s15, 0
    %p48 = por %p46, %p47
    %p49 = scmp.ne.s32.totalorder %s35, %s36
    %p50 = scmp.eq.s32.totalorder %s16, 1
    %p51 = por %p49, %p50
    %p53 = scmp.ne.s32.totalorder %s36, %s52
    %p54 = scmp.eq.s32.totalorder %s16, 0
    %p55 = por %p53, %p54
    %s56 = ssub.s32 %s17, %s29
    %p57 = scmp.eq.s32.totalorder %s56, 0
    %s59 = sadd.s32 %s58, 1
    %s60 = scalar_select %p57, %s58, %s59
    %p63 = pneg %p57
    %p64 = scmp.eq.s32.totalorder %s10, 1
    %p65 = por %p63, %p64
    %p66 = scmp.ne.s32.totalorder %s58, %s61
    %p67 = scmp.eq.s32.totalorder %s10, 0
    %p68 = por %p66, %p67
    %p69 = scmp.ne.s32.totalorder %s58, %s61
    %p70 = scmp.eq.s32.totalorder %s15, 1
    %p71 = por %p69, %p70
    %p72 = scmp.ne.s32.totalorder %s61, %s62
    %p73 = scmp.eq.s32.totalorder %s15, 0
    %p74 = por %p72, %p73
    %p75 = scmp.ne.s32.totalorder %s61, %s62
    %p76 = scmp.eq.s32.totalorder %s16, 1
    %p77 = por %p75, %p76
    %p79 = scmp.ne.s32.totalorder %s62, %s78
    %p80 = scmp.eq.s32.totalorder %s16, 0
    %p81 = por %p79, %p80
    %s82 = ssub.s32 %s18, %s25
    %p83 = scmp.eq.s32.totalorder %s82, 0
    %s85 = sadd.s32 %s84, 1
    %s86 = scalar_select %p83, %s84, %s85
    %p89 = pneg %p83
    %p90 = scmp.eq.s32.totalorder %s10, 1
    %p91 = por %p89, %p90
    %p92 = scmp.ne.s32.totalorder %s84, %s87
    %p93 = scmp.eq.s32.totalorder %s10, 0
    %p94 = por %p92, %p93
    %p95 = scmp.ne.s32.totalorder %s84, %s87
    %p96 = scmp.eq.s32.totalorder %s15, 1
    %p97 = por %p95, %p96
    %p98 = scmp.ne.s32.totalorder %s87, %s88
    %p99 = scmp.eq.s32.totalorder %s15, 0
    %p100 = por %p98, %p99
    %p101 = scmp.ne.s32.totalorder %s87, %s88
    %p102 = scmp.eq.s32.totalorder %s16, 1
    %p103 = por %p101, %p102
    %p105 = scmp.ne.s32.totalorder %s88, %s104
    %p106 = scmp.eq.s32.totalorder %s16, 0
    %p107 = por %p105, %p106
    %s108 = ssub.s32 %s18, %s25
    %p109 = scmp.eq.s32.totalorder %s108, 0
    %s111 = sadd.s32 %s110, 1
    %s112 = scalar_select %p109, %s110, %s111
    %p115 = pneg %p109
    %p116 = scmp.eq.s32.totalorder %s10, 1
    %p117 = por %p115, %p116
    %p118 = scmp.ne.s32.totalorder %s110, %s113
    %p119 = scmp.eq.s32.totalorder %s10, 0
    %p120 = por %p118, %p119
    %p121 = scmp.ne.s32.totalorder %s110, %s113
    %p122 = scmp.eq.s32.totalorder %s15, 1
    %p123 = por %p121, %p122
    %p124 = scmp.ne.s32.totalorder %s113, %s114
    %p125 = scmp.eq.s32.totalorder %s15, 0
    %p126 = por %p124, %p125
    %p127 = scmp.ne.s32.totalorder %s113, %s114
    %p128 = scmp.eq.s32.totalorder %s16, 1
    %p129 = por %p127, %p128
    %p131 = scmp.ne.s32.totalorder %s114, %s130
    %p132 = scmp.eq.s32.totalorder %s16, 0
    %p133 = por %p131, %p132
    %s134 = ssub.s32 %s17, %s29
    %s135 = ssub.s32 %s18, %s25
    %s136 = sor.u32 %s134, %s135
    %p137 = scmp.eq.s32.totalorder %s136, 0
    %s139 = sadd.s32 %s138, 1
    %s140 = scalar_select %p137, %s138, %s139
    %p143 = pneg %p137
    %p144 = scmp.eq.s32.totalorder %s10, 1
    %p145 = por %p143, %p144
    %p146 = scmp.ne.s32.totalorder %s138, %s141
    %p147 = scmp.eq.s32.totalorder %s10, 0
    %p148 = por %p146, %p147
    %p149 = scmp.ne.s32.totalorder %s138, %s141
    %p150 = scmp.eq.s32.totalorder %s15, 1
    %p151 = por %p149, %p150
    %p152 = scmp.ne.s32.totalorder %s141, %s142
    %p153 = scmp.eq.s32.totalorder %s15, 0
    %p154 = por %p152, %p153
    %p155 = scmp.ne.s32.totalorder %s141, %s142
    %p156 = scmp.eq.s32.totalorder %s16, 1
    %p157 = por %p155, %p156
    %p159 = scmp.ne.s32.totalorder %s142, %s158
    %p160 = scmp.eq.s32.totalorder %s16, 0
    %p161 = por %p159, %p160
    %p162 = scmp.le.s32.totalorder 1, %s10
    %p163 = scmp.lt.s32.totalorder %s10, 3
    %p164 = pnand %p162, %p163
    %p165 = pneg %p164
    // Predicated region
    $region9: #{tpu_custom_call.1} parent=5 // pred_check
      _
    $region10: #{tpu_custom_call.1} parent=5 // pred_check_branch
      %167 = sbr.rel (%p164) target = $region12
    $region11: #{tpu_custom_call.1} parent=5 // pred_region
      %s168 = ssub.s32 %s10, 1
      // Predicated region
      $region13: #{tpu_custom_call.1} parent=11 // pred_check
        %p169 = pneg %p100
      $region14: #{tpu_custom_call.1} parent=11 // pred_check_branch
        %171 = sbr.rel (%p169) target = $region16
      $region15: #{tpu_custom_call.1} parent=11 // pred_region
        %p172 = scmp.lt.s32.totalorder %s20, 0
        %s173 = scalar_select %p172, %s20, 0
        %s174 = smul.addr %s173, 8
        %s175 = scalar_lea.vmem %s2, %s174
      $region16: #{tpu_custom_call.1} parent=11 // pred_fallthru
        _
      // Predicated region
      $region17: #{tpu_custom_call.1} parent=11 // pred_check
        %p176 = pneg %p126
      $region18: #{tpu_custom_call.1} parent=11 // pred_check_branch
        %178 = sbr.rel (%p176) target = $region20
      $region19: #{tpu_custom_call.1} parent=11 // pred_region
        %p179 = scmp.lt.s32.totalorder %s20, 0
        %s180 = scalar_select %p179, %s20, 0
        %s181 = scalar_lea.vmem %s3, %s180
      $region20: #{tpu_custom_call.1} parent=11 // pred_fallthru
        _
    $region12: #{tpu_custom_call.1} parent=5 // pred_fallthru
      _
    %p182 = scmp.lt.s32.totalorder %s10, 2
    // Predicated region
    $region21: #{tpu_custom_call.1} parent=5 // pred_check
      %p183 = pneg %p182
    $region22: #{tpu_custom_call.1} parent=5 // pred_check_branch
      %185 = sbr.rel (%p183) target = $region24
    $region23: #{tpu_custom_call.1} parent=5 // pred_region
      // Predicated region
      $region25: #{tpu_custom_call.1} parent=23 // pred_check
        %p186 = pneg %p42
      $region26: #{tpu_custom_call.1} parent=23 // pred_check_branch
        %188 = sbr.rel (%p186) target = $region28
      $region27: #{tpu_custom_call.1} parent=23 // pred_region
        %p189 = scmp.lt.s32.totalorder %s17, 1
        %s190 = scalar_select %p189, %s17, 1
        %s191 = smul.addr %s190, 8
        %s192 = scalar_lea.vmem %s0, %s191
      $region28: #{tpu_custom_call.1} parent=23 // pred_fallthru
        _
      // Predicated region
      $region29: #{tpu_custom_call.1} parent=23 // pred_check
        %p193 = pneg %p68
      $region30: #{tpu_custom_call.1} parent=23 // pred_check_branch
        %195 = sbr.rel (%p193) target = $region32
      $region31: #{tpu_custom_call.1} parent=23 // pred_region
        %p196 = scmp.lt.s32.totalorder %s17, 1
        %s197 = scalar_select %p196, %s17, 1
        %s198 = smul.addr %s197, 8
        %s199 = scalar_lea.vmem %s1, %s198
      $region32: #{tpu_custom_call.1} parent=23 // pred_fallthru
        _
    $region24: #{tpu_custom_call.1} parent=5 // pred_fallthru
      _
    %p200 = scmp.le.s32.totalorder 1, %s10
    %p201 = scmp.lt.s32.totalorder %s10, 3
    %p202 = pnand %p200, %p201
    %p203 = pneg %p202
    // Predicated region
    $region33: #{tpu_custom_call.1} parent=5 // pred_check
      _
    $region34: #{tpu_custom_call.1} parent=5 // pred_check_branch
      %205 = sbr.rel (%p202) target = $region36
    $region35: #{tpu_custom_call.1} parent=5 // pred_region
      %s206 = ssub.s32 %s10, 1
      %p207 = scmp.lt.s32.totalorder %s19, 1
      %s208 = scalar_select %p207, %s19, 1
      %s209 = smul.addr %s208, 8
      %s210 = scalar_lea.vmem %s0, %s209
      %p211 = pneg %p48
      %p212 = pneg %p45
      %p213 = scmp.lt.s32.totalorder %s19, 1
      %s214 = scalar_select %p213, %s19, 1
      %s215 = smul.addr %s214, 8
      %s216 = scalar_lea.vmem %s1, %s215
      %p217 = pneg %p74
      %p218 = pneg %p71
      %p219 = scmp.lt.s32.totalorder %s20, 0
      %s220 = scalar_select %p219, %s20, 0
      %s221 = smul.addr %s220, 8
      %s222 = scalar_lea.vmem %s2, %s221
      %p223 = pneg %p100
      %p224 = pneg %p97
      %p225 = scmp.lt.s32.totalorder %s20, 0
      %s226 = scalar_select %p225, %s20, 0
      %s227 = scalar_lea.vmem %s3, %s226
      %p228 = pneg %p126
      %p229 = pneg %p123
      %p230 = pneg %p154
      %p231 = pneg %p151
      %p232 = scmp.lt.s32.totalorder %s19, 1
      %s233 = scalar_select %p232, %s19, 1
      %p234 = scmp.lt.s32.totalorder %s20, 0
      %s235 = scalar_select %p234, %s20, 0
      %s236 = sadd.s32 %s235, %s233
      %s237 = smul.addr %s236, 8
      %s238 = scalar_lea.vmem %s4, %s237
      %p239 = scmp.lt.s32.totalorder %s19, 1
      %s240 = scalar_select %p239, %s19, 1
      %s241 = smul.addr %s240, 8
      %s242 = scalar_lea.vmem %s0, %s241
      %p243 = scmp.lt.s32.totalorder %s19, 1
      %s244 = scalar_select %p243, %s19, 1
      %s245 = smul.addr %s244, 8
      %s246 = scalar_lea.vmem %s1, %s245
      %p247 = scmp.lt.s32.totalorder %s20, 0
      %s248 = scalar_select %p247, %s20, 0
      %s249 = smul.addr %s248, 8
      %s250 = scalar_lea.vmem %s2, %s249
      %p251 = scmp.lt.s32.totalorder %s20, 0
      %s252 = scalar_select %p251, %s20, 0
      %s253 = scalar_lea.vmem %s3, %s252
      %p254 = scmp.lt.s32.totalorder %s19, 1
      %s255 = scalar_select %p254, %s19, 1
      %p256 = scmp.lt.s32.totalorder %s20, 0
      %s257 = scalar_select %p256, %s20, 0
      %s258 = sadd.s32 %s257, %s255
      %s259 = smul.addr %s258, 8
      %s260 = scalar_lea.vmem %s4, %s259
      %v261 = vld [vmem:[%s250] sm:$0xff]
      %v262 = vld [vmem:[%s253] sm:$0x1]
      %v263 = vld [vmem:[%s242] sm:$0xff]
      %v264 = vld [vmem:[%s246] sm:$0xff]
      %266 = vrot.lane.b32.xlu0 %v264, 4
      %v267 = vpop.permute.xlu0 %266
      %vm269 = vcmask 31744
      %v270 = vsel %vm269, %v263, %v267
      %v272 = vperm.slane %v262, 0
      %274 = vxpose.xlu0.b32.start [1/16] %v270, 128
      %275 = vxpose.xlu0.b32.cont [2/16] 0.0, 128
      %276 = vxpose.xlu0.b32.cont [3/16] 0.0, 128
      %277 = vxpose.xlu0.b32.cont [4/16] 0.0, 128
      %278 = vxpose.xlu0.b32.cont [5/16] 0.0, 128
      %279 = vxpose.xlu0.b32.cont [6/16] 0.0, 128
      %280 = vxpose.xlu0.b32.cont [7/16] 0.0, 128
      %281 = vxpose.xlu0.b32.cont [8/16] 0.0, 128
      %282 = vxpose.xlu0.b32.cont [9/16] 0.0, 128
      %283 = vxpose.xlu0.b32.cont [10/16] 0.0, 128
      %284 = vxpose.xlu0.b32.cont [11/16] 0.0, 128
      %285 = vxpose.xlu0.b32.cont [12/16] 0.0, 128
      %286 = vxpose.xlu0.b32.cont [13/16] 0.0, 128
      %287 = vxpose.xlu0.b32.cont [14/16] 0.0, 128
      %288 = vxpose.xlu0.b32.cont [15/16] 0.0, 128
      %289 = vxpose.xlu0.b32.end [16/16] 0.0, 128
      %v290 = vpop.trf.xlu0
      %v291 = vpop.trf.xlu0
      %v292 = vpop.trf.xlu0
      %v293 = vpop.trf.xlu0
      %v294 = vpop.trf.xlu0
      %v295 = vpop.trf.xlu0
      %v296 = vpop.trf.xlu0
      %v297 = vpop.trf.xlu0
      %v298 = vpop.trf.xlu0
      %v299 = vpop.trf.xlu0
      %v300 = vpop.trf.xlu0
      %v301 = vpop.trf.xlu0
      %v302 = vpop.trf.xlu0
      %v303 = vpop.trf.xlu0
      %v304 = vpop.trf.xlu0
      %v305 = vpop.trf.xlu0
      %vm306 = vcmask 64512
      %v308 = vsel %vm306, %v290, 0
      %310 = vmatpush.msra.mxu0 0.0
      %311 = vmatpush.msra.mxu0 0.0
      %312 = vmatpush.msra.mxu0 0.0
      %313 = vmatpush.msra.mxu0 0.0
      %314 = vmatpush.msra.mxu0 0.0
      %315 = vmatpush.msra.mxu0 0.0
      %316 = vmatpush.msra.mxu0 0.0
      %317 = vmatpush.msra.mxu0 0.0
      %318 = vmatpush.msra.mxu0 0.0
      %319 = vmatpush.msra.mxu0 0.0
      %320 = vmatpush.msra.mxu0 0.0
      %321 = vmatpush.msra.mxu0 0.0
      %322 = vmatpush.msra.mxu0 0.0
      %323 = vmatpush.msra.mxu0 0.0
      %324 = vmatpush.msra.mxu0 0.0
      %325 = vmatpush.msra.mxu0 %v261
      %326 = vmatmul.f32.gmra.mxu0 %v308
      %v327 = vpop.f32.mrf.mxu0
      %v328 = vadd.f32 %v272, %v327
      %329 = vdwg.mxu0
      %vm330 = vcmask 260096
      %331 = vst.msk [vmem:[%s260] sm:$0x7f] %vm330, %v328
      %p332 = scmp.lt.s32.totalorder %s19, 1
      %s333 = scalar_select %p332, %s19, 1
      %p334 = scmp.lt.s32.totalorder %s20, 0
      %s335 = scalar_select %p334, %s20, 0
      %s336 = sadd.s32 %s335, %s333
      %s337 = smul.addr %s336, 8
      %s338 = scalar_lea.vmem %s4, %s337
      // Predicated region
      $region37: #{tpu_custom_call.1} parent=35 // pred_check
        %p339 = pneg %p151
      $region38: #{tpu_custom_call.1} parent=35 // pred_check_branch
        %341 = sbr.rel (%p339) target = $region40
      $region39: #{tpu_custom_call.1} parent=35 // pred_region
        _
      $region40: #{tpu_custom_call.1} parent=35 // pred_fallthru
        _
    $region36: #{tpu_custom_call.1} parent=5 // pred_fallthru
      _
    %p342 = scmp.le.s32.totalorder 2, %s10
    // Predicated region
    $region41: #{tpu_custom_call.1} parent=5 // pred_check
      %p343 = pneg %p342
    $region42: #{tpu_custom_call.1} parent=5 // pred_check_branch
      %345 = sbr.rel (%p343) target = $region44
    $region43: #{tpu_custom_call.1} parent=5 // pred_region
      %s346 = ssub.s32 %s10, 2
      // Predicated region
      $region45: #{tpu_custom_call.1} parent=43 // pred_check
        %p347 = pneg %p157
      $region46: #{tpu_custom_call.1} parent=43 // pred_check_branch
        %349 = sbr.rel (%p347) target = $region48
      $region47: #{tpu_custom_call.1} parent=43 // pred_region
        %p350 = scmp.lt.s32.totalorder %s21, 1
        %s351 = scalar_select %p350, %s21, 1
        %p352 = scmp.lt.s32.totalorder %s22, 0
        %s353 = scalar_select %p352, %s22, 0
        %s354 = sadd.s32 %s353, %s351
        %s355 = smul.addr %s354, 8
        %s356 = scalar_lea.vmem %s4, %s355
      $region48: #{tpu_custom_call.1} parent=43 // pred_fallthru
        _
    $region44: #{tpu_custom_call.1} parent=5 // pred_fallthru
      _
  $region6: #{tpu_custom_call.1} parent=0 // loop_footer
    %s14 = sadd.s32 1, %s10
  $region7: #{tpu_custom_call.1} parent=0 // loop_footer_branch
    %9 = sbr.rel target = $region3
  $region8: #{tpu_custom_call.1} parent=0 // loop_exit
    _

</llo_original>
